<compile_context>
chip_gen: v7x
topology: tpu7x:2x2x1
jax: 0.10.0
libtpu: 0.0.40
codegen_flags: <defaults>
</compile_context>

<pallas_src>
import functools

import jax
import jax.numpy as jnp
from jax.experimental import pallas as pl
from jax.experimental.pallas import tpu as pltpu

POS_IOU_THR = 0.5
NEG_IOU_THR = 0.5
MIN_POS_IOU = 0.0
EPS = 1e-6
PAD_IOU = -1.0           # sentinel IoU for padded gt rows / padded bbox lanes
LANE = 128
SUBLANE = 8
DEFAULT_TILE_N = 2048    # 2048-lane tiles: >>0.35us/step, well under scoped VMEM


def _round_up(x, m):
    return (x + m - 1) // m * m


def _maxiou_kernel(b_ref, g_ref, out_ref, gtmax_ref, *,
                   num_gts, num_bboxes, tile_n, n_pad):
    """Two-phase kernel over grid=(2, num_tiles).

    phase = program_id(0), tile = program_id(1).
      phase 0: accumulate per-gt max IoU over all bbox tiles into gtmax_ref.
      phase 1: recompute this tile's IoUs (identical traced code => identical
               bits) and emit the per-bbox assignment.

    b_ref    : (4, TN) f32      bbox coords, bboxes on lanes (rows x1,y1,x2,y2)
    g_ref    : (K_pad, 4) f32   gt coords, gts on sublanes (constant block, VMEM-resident)
    out_ref  : (1, TN) i32      assigned gt index + 1 (0 = negative, -1 = ignore)
    gtmax_ref: (K_pad, 1) f32   VMEM scratch, persists across the whole grid
    """
    phase = pl.program_id(0)
    tile = pl.program_id(1)
    k_pad = g_ref.shape[0]

    # ---- pairwise IoU, shape (K_pad, TN): gts on sublanes, bboxes on lanes.
    # Each (1,TN)/(K,1) operand below participates in exactly one mixed-rank
    # op, so there are no redundant sublane re-broadcasts to hoist.
    bx1 = b_ref[0:1, :]
    by1 = b_ref[1:2, :]
    bx2 = b_ref[2:3, :]
    by2 = b_ref[3:4, :]
    gx1 = g_ref[:, 0:1]
    gy1 = g_ref[:, 1:2]
    gx2 = g_ref[:, 2:3]
    gy2 = g_ref[:, 3:4]

    area_b = (bx2 - bx1) * (by2 - by1)                       # (1, TN)
    area_g = (gx2 - gx1) * (gy2 - gy1)                       # (K, 1)
    w = jnp.maximum(jnp.minimum(gx2, bx2) - jnp.maximum(gx1, bx1), 0.0)
    h = jnp.maximum(jnp.minimum(gy2, by2) - jnp.maximum(gy1, by1), 0.0)
    inter = w * h                                            # (K, TN)
    union = area_g + area_b - inter
    ious = inter / jnp.maximum(union, EPS)                   # (K, TN)

    # ---- mask layout padding so it can never win a max or tie a gt_max.
    if num_gts < k_pad:
        row_ok = jax.lax.broadcasted_iota(jnp.int32, (k_pad, 1), 0) < num_gts
        ious = jnp.where(row_ok, ious, PAD_IOU)
    if num_bboxes < n_pad:
        lane = (jax.lax.broadcasted_iota(jnp.int32, (1, tile_n), 1)
                + tile * tile_n)
        ious = jnp.where(lane < num_bboxes, ious, PAD_IOU)

    # ---- phase 0: accumulate per-gt max IoU over all bbox tiles.
    @pl.when((phase == 0) & (tile == 0))
    def _init():
        gtmax_ref[...] = jnp.full(gtmax_ref.shape, PAD_IOU, gtmax_ref.dtype)

    @pl.when(phase == 0)
    def _accumulate():
        gtmax_ref[...] = jnp.maximum(
            gtmax_ref[...], jnp.max(ious, axis=1, keepdims=True))

    # ---- phase 1: per-bbox assignment (mmdet assign_wrt_overlaps rules).
    @pl.when(phase == 1)
    def _assign():
        gt_idx = jax.lax.broadcasted_iota(jnp.int32, ious.shape, 0)  # built once, reused
        # per-bbox max over gts + first-index argmax (torch.max(dim=0) style)
        max_ov = jnp.max(ious, axis=0, keepdims=True)                # (1, TN)
        argmax = jnp.min(jnp.where(ious == max_ov, gt_idx, k_pad),
                         axis=0, keepdims=True)                      # (1, TN)
        gt_max = gtmax_ref[...]                                      # (K, 1)

        # 1) init to -1 (ignore)
        assigned = jnp.full(max_ov.shape, -1, dtype=jnp.int32)
        # 2) negatives: 0 <= max_overlap < neg_iou_thr -> 0
        assigned = jnp.where((max_ov >= 0.0) & (max_ov < NEG_IOU_THR),
                             jnp.zeros_like(assigned), assigned)
        # 3) positives: max_overlap >= pos_iou_thr -> argmax + 1
        assigned = jnp.where(max_ov >= POS_IOU_THR, argmax + 1, assigned)
        # 4) low-quality matching (gt_max_assign_all=True): every bbox hitting
        #    gt_max[i] (>= min_pos_iou) gets i+1; sequential overwrite by
        #    increasing i == take the LARGEST matching i.
        low_match = (ious == gt_max) & (gt_max >= MIN_POS_IOU)       # (K, TN)
        low_idx = jnp.max(jnp.where(low_match, gt_idx, -1),
                          axis=0, keepdims=True)                     # (1, TN)
        assigned = jnp.where(low_idx >= 0, low_idx + 1, assigned)

        out_ref[...] = assigned


def maxiou_assign_t(bboxes_t, gt_bboxes, *, tile_n=DEFAULT_TILE_N):
    """bboxes_t: (4, N) float32 coord-major bboxes (no transpose needed),
    gt_bboxes: (K, 4) float32.  Returns gt_inds (N,) int32 (torch returns
    int64; values are identical)."""
    assert bboxes_t.ndim == 2 and bboxes_t.shape[0] == 4
    assert gt_bboxes.ndim == 2 and gt_bboxes.shape[1] == 4
    n = bboxes_t.shape[1]
    k = gt_bboxes.shape[0]
    assert n >= 1 and k >= 1  # TODO(synk): empty fast paths not handled.

    n_lane = _round_up(n, LANE)
    tn = min(_round_up(tile_n, LANE), n_lane)
    n_pad = _round_up(n_lane, tn)
    num_tiles = n_pad // tn
    k_pad = _round_up(k, SUBLANE)

    b = bboxes_t.astype(jnp.float32)
    if n_pad != n:
        b = jnp.pad(b, ((0, 0), (0, n_pad - n)))     # zero boxes: IoU == 0 (also masked)
    g = gt_bboxes.astype(jnp.float32)
    if k_pad != k:
        g = jnp.pad(g, ((0, k_pad - k), (0, 0)))     # masked to IoU=-1 in-kernel

    kernel = functools.partial(
        _maxiou_kernel, num_gts=k, num_bboxes=n, tile_n=tn, n_pad=n_pad)

    out = pl.pallas_call(
        kernel,
        out_shape=jax.ShapeDtypeStruct((1, n_pad), jnp.int32),
        grid=(2, num_tiles),
        in_specs=[
            pl.BlockSpec((4, tn), lambda p, i: (0, i)),      # bbox tile (pipelined)
            pl.BlockSpec((k_pad, 4), lambda p, i: (0, 0)),   # gts, resident in VMEM
        ],
        # Phase 0 pins the output index to block 0 (no garbage write-backs);
        # phase 1 walks the tiles, each lane-dense tile written back once.
        out_specs=pl.BlockSpec((1, tn), lambda p, i: (0, i * p)),
        scratch_shapes=[pltpu.VMEM((k_pad, 1), jnp.float32)],
        compiler_params=pltpu.CompilerParams(
            # Tile axis must stay "arbitrary": the gt_max scratch is per-core,
            # so a "parallel" (megacore) split would break the global reduction.
            dimension_semantics=("arbitrary", "arbitrary")),
        cost_estimate=pl.CostEstimate(
            flops=2 * 20 * k_pad * n_pad,
            bytes_accessed=2 * 16 * n_pad + 4 * n_pad + 16 * k_pad,
            transcendentals=0),
    )(b, g)
    return out[0, :n]


def maxiou_assign(bboxes, gt_bboxes, *, tile_n=DEFAULT_TILE_N):
    """Compatibility wrapper for callers holding (N, 4) bboxes.  Prefer
    maxiou_assign_t with coord-major (4, N) data to avoid the extra HBM
    transpose pass (the kernel is memory-bound)."""
    return maxiou_assign_t(jnp.transpose(bboxes), gt_bboxes, tile_n=tile_n)


def _reference_assign(bboxes, gt_bboxes):
    """Pure-JAX reference mirroring mmdet MaxIoUAssigner.assign_wrt_overlaps."""
    b = bboxes.astype(jnp.float32)
    g = gt_bboxes.astype(jnp.float32)
    area_b = (b[:, 2] - b[:, 0]) * (b[:, 3] - b[:, 1])
    area_g = (g[:, 2] - g[:, 0]) * (g[:, 3] - g[:, 1])
    lt = jnp.maximum(g[:, None, :2], b[None, :, :2])
    rb = jnp.minimum(g[:, None, 2:], b[None, :, 2:])
    wh = jnp.clip(rb - lt, 0.0)
    inter = wh[..., 0] * wh[..., 1]
    union = area_g[:, None] + area_b[None, :] - inter
    ious = inter / jnp.maximum(union, EPS)          # (K, N)

    k = ious.shape[0]
    max_ov = ious.max(axis=0)
    argmax = ious.argmax(axis=0)
    gt_max = ious.max(axis=1)

    assigned = jnp.full((b.shape[0],), -1, dtype=jnp.int32)
    assigned = jnp.where((max_ov >= 0.0) & (max_ov < NEG_IOU_THR), 0, assigned)
    assigned = jnp.where(max_ov >= POS_IOU_THR,
                         (argmax + 1).astype(jnp.int32), assigned)
    low_match = (ious == gt_max[:, None]) & (gt_max[:, None] >= MIN_POS_IOU)
    gt_idx = jnp.arange(k, dtype=jnp.int32)[:, None]
    low_idx = jnp.max(jnp.where(low_match, gt_idx, -1), axis=0)
    assigned = jnp.where(low_idx >= 0, low_idx + 1, assigned)
    return assigned


def _make_boxes_t(key, num, lo, hi, min_wh, max_wh):
    """Boxes generated directly in coord-major (4, N) layout: rows x1,y1,x2,y2."""
    k1, k2 = jax.random.split(key)
    xy = jax.random.uniform(k1, (2, num), minval=lo, maxval=hi, dtype=jnp.float32)
    wh = jax.random.uniform(k2, (2, num), minval=min_wh, maxval=max_wh,
                            dtype=jnp.float32)
    return jnp.concatenate([xy, xy + wh], axis=0)            # (4, N)


def _make_boxes(key, num, lo, hi, min_wh, max_wh):
    return jnp.transpose(_make_boxes_t(key, num, lo, hi, min_wh, max_wh))  # (N, 4)


if __name__ == "__main__":
    key = jax.random.PRNGKey(0)
    key_b1, key_g1, key_b2, key_g2 = jax.random.split(key, 4)

    # Case 1: unaligned sizes, multiple tiles -> exercises the two-phase
    # gt_max reduction and the lane/sublane padding masks.
    n1, ngt1 = 300, 5
    bboxes_t1 = _make_boxes_t(key_b1, n1, 0.0, 12.0, 2.0, 6.0)   # (4, 300)
    gts1 = _make_boxes(key_g1, ngt1, 0.0, 12.0, 2.0, 6.0)        # (5, 4)
    gt_inds1 = maxiou_assign_t(bboxes_t1, gts1, tile_n=128)      # 3 tiles of 128
    jax.block_until_ready(gt_inds1)
    ref1 = _reference_assign(jnp.transpose(bboxes_t1), gts1)
    assert gt_inds1.shape == (n1,)
    assert bool(jnp.all(gt_inds1 == ref1)), "case 1: mismatch vs pure-JAX reference"

    # Case 2: lane/sublane-aligned sizes, single tile (original test shape).
    n2, ngt2 = 128, 8
    bboxes_t2 = _make_boxes_t(key_b2, n2, 0.0, 12.0, 2.0, 6.0)   # (4, 128)
    gts2 = _make_boxes(key_g2, ngt2, 0.0, 12.0, 2.0, 6.0)        # (8, 4)
    gt_inds2 = maxiou_assign_t(bboxes_t2, gts2)
    jax.block_until_ready(gt_inds2)
    ref2 = _reference_assign(jnp.transpose(bboxes_t2), gts2)
    assert gt_inds2.shape == (n2,)
    assert bool(jnp.all(gt_inds2 == ref2)), "case 2: mismatch vs pure-JAX reference"

    print("KERNEL_OK")
</pallas_src>

<mosaic_0001>
module attributes {stable_mosaic.version = 11 : i64} {
  func.func @_maxiou_kernel(%arg0: i32, %arg1: i32, %arg2: memref<4x128xf32, #tpu.memory_space<vmem>>, %arg3: memref<8x4xf32, #tpu.memory_space<vmem>>, %arg4: memref<1x128xi32, #tpu.memory_space<vmem>>, %arg5: memref<8x1xf32, #tpu.memory_space<vmem>>) attributes {dimension_semantics = [#tpu.dimension_semantics<arbitrary>, #tpu.dimension_semantics<arbitrary>], iteration_bounds = array<i64: 2, 3>, scalar_prefetch = 0 : i64, scratch_operands = 1 : i64, tpu.core_type = #tpu.core_type<tc>, window_params = [{transform_indices = @transform_0, window_bounds = array<i64: 4, 128>}, {pipeline_mode = #tpu.pipeline_mode<synchronous>, transform_indices = @transform_1, window_bounds = array<i64: 8, 4>}, {transform_indices = @transform_2, window_bounds = array<i64: 1, 128>}]} {
    %c0 = arith.constant 0 : index
    %c0_0 = arith.constant 0 : index
    %0 = vector.load %arg2[%c0, %c0_0] : memref<4x128xf32, #tpu.memory_space<vmem>>, vector<1x128xf32>
    %c1 = arith.constant 1 : index
    %c0_1 = arith.constant 0 : index
    %1 = vector.load %arg2[%c1, %c0_1] : memref<4x128xf32, #tpu.memory_space<vmem>>, vector<1x128xf32>
    %c2 = arith.constant 2 : index
    %c0_2 = arith.constant 0 : index
    %2 = vector.load %arg2[%c2, %c0_2] : memref<4x128xf32, #tpu.memory_space<vmem>>, vector<1x128xf32>
    %c3 = arith.constant 3 : index
    %c0_3 = arith.constant 0 : index
    %3 = vector.load %arg2[%c3, %c0_3] : memref<4x128xf32, #tpu.memory_space<vmem>>, vector<1x128xf32>
    %c0_4 = arith.constant 0 : index
    %c0_5 = arith.constant 0 : index
    %4 = vector.load %arg3[%c0_4, %c0_5] : memref<8x4xf32, #tpu.memory_space<vmem>>, vector<8x1xf32>
    %c0_6 = arith.constant 0 : index
    %c1_7 = arith.constant 1 : index
    %5 = vector.load %arg3[%c0_6, %c1_7] : memref<8x4xf32, #tpu.memory_space<vmem>>, vector<8x1xf32>
    %c0_8 = arith.constant 0 : index
    %c2_9 = arith.constant 2 : index
    %6 = vector.load %arg3[%c0_8, %c2_9] : memref<8x4xf32, #tpu.memory_space<vmem>>, vector<8x1xf32>
    %c0_10 = arith.constant 0 : index
    %c3_11 = arith.constant 3 : index
    %7 = vector.load %arg3[%c0_10, %c3_11] : memref<8x4xf32, #tpu.memory_space<vmem>>, vector<8x1xf32>
    %8 = arith.subf %2, %0 : vector<1x128xf32>
    %9 = arith.subf %3, %1 : vector<1x128xf32>
    %10 = arith.mulf %8, %9 : vector<1x128xf32>
    %11 = arith.subf %6, %4 : vector<8x1xf32>
    %12 = arith.subf %7, %5 : vector<8x1xf32>
    %13 = arith.mulf %11, %12 : vector<8x1xf32>
    %14 = vector.broadcast %6 : vector<8x1xf32> to vector<8x128xf32>
    %15 = vector.broadcast %2 : vector<1x128xf32> to vector<8x128xf32>
    %16 = arith.minimumf %14, %15 : vector<8x128xf32>
    %17 = vector.broadcast %4 : vector<8x1xf32> to vector<8x128xf32>
    %18 = vector.broadcast %0 : vector<1x128xf32> to vector<8x128xf32>
    %19 = arith.maximumf %17, %18 : vector<8x128xf32>
    %20 = arith.subf %16, %19 : vector<8x128xf32>
    %cst = arith.constant 0.000000e+00 : f32
    %21 = vector.broadcast %cst : f32 to vector<8x128xf32>
    %22 = arith.maximumf %20, %21 : vector<8x128xf32>
    %23 = vector.broadcast %7 : vector<8x1xf32> to vector<8x128xf32>
    %24 = vector.broadcast %3 : vector<1x128xf32> to vector<8x128xf32>
    %25 = arith.minimumf %23, %24 : vector<8x128xf32>
    %26 = vector.broadcast %5 : vector<8x1xf32> to vector<8x128xf32>
    %27 = vector.broadcast %1 : vector<1x128xf32> to vector<8x128xf32>
    %28 = arith.maximumf %26, %27 : vector<8x128xf32>
    %29 = arith.subf %25, %28 : vector<8x128xf32>
    %cst_12 = arith.constant 0.000000e+00 : f32
    %30 = vector.broadcast %cst_12 : f32 to vector<8x128xf32>
    %31 = arith.maximumf %29, %30 : vector<8x128xf32>
    %32 = arith.mulf %22, %31 : vector<8x128xf32>
    %33 = vector.broadcast %13 : vector<8x1xf32> to vector<8x128xf32>
    %34 = vector.broadcast %10 : vector<1x128xf32> to vector<8x128xf32>
    %35 = arith.addf %33, %34 : vector<8x128xf32>
    %36 = arith.subf %35, %32 : vector<8x128xf32>
    %cst_13 = arith.constant 9.99999997E-7 : f32
    %37 = vector.broadcast %cst_13 : f32 to vector<8x128xf32>
    %38 = arith.maximumf %36, %37 : vector<8x128xf32>
    %39 = arith.divf %32, %38 : vector<8x128xf32>
    %40 = tpu.iota {dimensions = array<i32: 0>} : vector<8x1xi32>
    %c5_i32 = arith.constant 5 : i32
    %41 = vector.broadcast %c5_i32 : i32 to vector<8x1xi32>
    %42 = arith.cmpi slt, %40, %41 : vector<8x1xi32>
    %cst_14 = arith.constant -1.000000e+00 : f32
    %43 = vector.shape_cast %42 : vector<8x1xi1> to vector<8x1xi1>
    %44 = vector.broadcast %43 : vector<8x1xi1> to vector<8x128xi1>
    %45 = vector.broadcast %cst_14 : f32 to vector<8x128xf32>
    %46 = arith.select %44, %39, %45 : vector<8x128xi1>, vector<8x128xf32>
    %47 = tpu.iota {dimensions = array<i32: 1>} : vector<1x128xi32>
    %c128_i32 = arith.constant 128 : i32
    %48 = arith.muli %arg1, %c128_i32 : i32
    %49 = vector.broadcast %48 : i32 to vector<1x128xi32>
    %50 = arith.addi %47, %49 : vector<1x128xi32>
    %c300_i32 = arith.constant 300 : i32
    %51 = vector.broadcast %c300_i32 : i32 to vector<1x128xi32>
    %52 = arith.cmpi slt, %50, %51 : vector<1x128xi32>
    %cst_15 = arith.constant -1.000000e+00 : f32
    %53 = vector.shape_cast %52 : vector<1x128xi1> to vector<1x128xi1>
    %54 = vector.broadcast %53 : vector<1x128xi1> to vector<8x128xi1>
    %55 = vector.broadcast %cst_15 : f32 to vector<8x128xf32>
    %56 = arith.select %54, %46, %55 : vector<8x128xi1>, vector<8x128xf32>
    %c0_i32 = arith.constant 0 : i32
    %57 = arith.cmpi eq, %arg0, %c0_i32 : i32
    %c0_i32_16 = arith.constant 0 : i32
    %58 = arith.cmpi eq, %arg1, %c0_i32_16 : i32
    %59 = arith.andi %57, %58 : i1
    %60 = arith.extui %59 : i1 to i32
    %c0_i32_17 = arith.constant 0 : i32
    %61 = arith.cmpi ne, %60, %c0_i32_17 : i32
    scf.if %61 {
      %cst_21 = arith.constant -1.000000e+00 : f32
      %68 = vector.broadcast %cst_21 : f32 to vector<8x1xf32>
      %c0_22 = arith.constant 0 : index
      %c0_23 = arith.constant 0 : index
      %69 = vector.load %arg5[%c0_22, %c0_23] : memref<8x1xf32, #tpu.memory_space<vmem>>, vector<8x1xf32>
      tpu.vector_store %arg5[%c0_22, %c0_23], %68 {strides = array<i32>} : memref<8x1xf32, #tpu.memory_space<vmem>>, vector<8x1xf32>,
    } else {
    }
    %c0_i32_18 = arith.constant 0 : i32
    %62 = arith.cmpi eq, %arg0, %c0_i32_18 : i32
    %63 = arith.extui %62 : i1 to i32
    %c0_i32_19 = arith.constant 0 : i32
    %64 = arith.cmpi ne, %63, %c0_i32_19 : i32
    scf.if %64 {
      %c0_21 = arith.constant 0 : index
      %c0_22 = arith.constant 0 : index
      %68 = vector.load %arg5[%c0_21, %c0_22] : memref<8x1xf32, #tpu.memory_space<vmem>>, vector<8x1xf32>
      %cst_23 = arith.constant dense<0xFF800000> : vector<8xf32>
      %69 = vector.multi_reduction <maximumf>, %56, %cst_23 [1] : vector<8x128xf32> to vector<8xf32>
      %70 = vector.shape_cast %69 : vector<8xf32> to vector<8x1xf32>
      %71 = arith.maximumf %68, %70 : vector<8x1xf32>
      %c0_24 = arith.constant 0 : index
      %c0_25 = arith.constant 0 : index
      %72 = vector.load %arg5[%c0_24, %c0_25] : memref<8x1xf32, #tpu.memory_space<vmem>>, vector<8x1xf32>
      tpu.vector_store %arg5[%c0_24, %c0_25], %71 {strides = array<i32>} : memref<8x1xf32, #tpu.memory_space<vmem>>, vector<8x1xf32>,
    } else {
    }
    %c1_i32 = arith.constant 1 : i32
    %65 = arith.cmpi eq, %arg0, %c1_i32 : i32
    %66 = arith.extui %65 : i1 to i32
    %c0_i32_20 = arith.constant 0 : i32
    %67 = arith.cmpi ne, %66, %c0_i32_20 : i32
    scf.if %67 {
      %68 = tpu.iota {dimensions = array<i32: 0>} : vector<8x128xi32>
      %cst_21 = arith.constant dense<0xFF800000> : vector<128xf32>
      %69 = vector.multi_reduction <maximumf>, %56, %cst_21 [0] : vector<8x128xf32> to vector<128xf32>
      %70 = vector.shape_cast %69 : vector<128xf32> to vector<1x128xf32>
      %71 = vector.broadcast %70 : vector<1x128xf32> to vector<8x128xf32>
      %72 = arith.cmpf oeq, %56, %71 : vector<8x128xf32>
      %c8_i32 = arith.constant 8 : i32
      %73 = vector.broadcast %c8_i32 : i32 to vector<8x128xi32>
      %74 = arith.select %72, %68, %73 : vector<8x128xi1>, vector<8x128xi32>
      %cst_22 = arith.constant dense<2147483647> : vector<128xi32>
      %75 = vector.multi_reduction <minsi>, %74, %cst_22 [0] : vector<8x128xi32> to vector<128xi32>
      %76 = vector.shape_cast %75 : vector<128xi32> to vector<1x128xi32>
      %c0_23 = arith.constant 0 : index
      %c0_24 = arith.constant 0 : index
      %77 = vector.load %arg5[%c0_23, %c0_24] : memref<8x1xf32, #tpu.memory_space<vmem>>, vector<8x1xf32>
      %c-1_i32 = arith.constant -1 : i32
      %78 = vector.broadcast %c-1_i32 : i32 to vector<1x128xi32>
      %cst_25 = arith.constant 0.000000e+00 : f32
      %79 = vector.broadcast %cst_25 : f32 to vector<1x128xf32>
      %80 = arith.cmpf oge, %70, %79 : vector<1x128xf32>
      %cst_26 = arith.constant 5.000000e-01 : f32
      %81 = vector.broadcast %cst_26 : f32 to vector<1x128xf32>
      %82 = arith.cmpf olt, %70, %81 : vector<1x128xf32>
      %83 = arith.andi %80, %82 : vector<1x128xi1>
      %c0_i32_27 = arith.constant 0 : i32
      %84 = vector.broadcast %c0_i32_27 : i32 to vector<1x128xi32>
      %85 = arith.select %83, %84, %78 : vector<1x128xi1>, vector<1x128xi32>
      %cst_28 = arith.constant 5.000000e-01 : f32
      %86 = vector.broadcast %cst_28 : f32 to vector<1x128xf32>
      %87 = arith.cmpf oge, %70, %86 : vector<1x128xf32>
      %c1_i32_29 = arith.constant 1 : i32
      %88 = vector.broadcast %c1_i32_29 : i32 to vector<1x128xi32>
      %89 = arith.addi %76, %88 : vector<1x128xi32>
      %90 = arith.select %87, %89, %85 : vector<1x128xi1>, vector<1x128xi32>
      %91 = vector.broadcast %77 : vector<8x1xf32> to vector<8x128xf32>
      %92 = arith.cmpf oeq, %56, %91 : vector<8x128xf32>
      %cst_30 = arith.constant 0.000000e+00 : f32
      %93 = vector.broadcast %cst_30 : f32 to vector<8x1xf32>
      %94 = arith.cmpf oge, %77, %93 : vector<8x1xf32>
      %95 = vector.broadcast %94 : vector<8x1xi1> to vector<8x128xi1>
      %96 = arith.andi %92, %95 : vector<8x128xi1>
      %c-1_i32_31 = arith.constant -1 : i32
      %97 = vector.broadcast %c-1_i32_31 : i32 to vector<8x128xi32>
      %98 = arith.select %96, %68, %97 : vector<8x128xi1>, vector<8x128xi32>
      %cst_32 = arith.constant dense<-2147483648> : vector<128xi32>
      %99 = vector.multi_reduction <maxsi>, %98, %cst_32 [0] : vector<8x128xi32> to vector<128xi32>
      %100 = vector.shape_cast %99 : vector<128xi32> to vector<1x128xi32>
      %c0_i32_33 = arith.constant 0 : i32
      %101 = vector.broadcast %c0_i32_33 : i32 to vector<1x128xi32>
      %102 = arith.cmpi sge, %100, %101 : vector<1x128xi32>
      %c1_i32_34 = arith.constant 1 : i32
      %103 = vector.broadcast %c1_i32_34 : i32 to vector<1x128xi32>
      %104 = arith.addi %100, %103 : vector<1x128xi32>
      %105 = arith.select %102, %104, %90 : vector<1x128xi1>, vector<1x128xi32>
      %c0_35 = arith.constant 0 : index
      %c0_36 = arith.constant 0 : index
      %106 = vector.load %arg4[%c0_35, %c0_36] : memref<1x128xi32, #tpu.memory_space<vmem>>, vector<1x128xi32>
      tpu.vector_store %arg4[%c0_35, %c0_36], %105 {strides = array<i32>} : memref<1x128xi32, #tpu.memory_space<vmem>>, vector<1x128xi32>,
    } else {
    }
    return
  }
  func.func @transform_0(%arg0: i32, %arg1: i32) -> (i32, i32) {
    %c0_i32 = arith.constant 0 : i32
    %c0_i32_0 = arith.constant 0 : i32
    return %c0_i32, %arg1 : i32, i32
  }
  func.func @transform_1(%arg0: i32, %arg1: i32) -> (i32, i32) {
    %c0_i32 = arith.constant 0 : i32
    %c0_i32_0 = arith.constant 0 : i32
    %c0_i32_1 = arith.constant 0 : i32
    return %c0_i32, %c0_i32_0 : i32, i32
  }
  func.func @transform_2(%arg0: i32, %arg1: i32) -> (i32, i32) {
    %0 = arith.muli %arg1, %arg0 : i32
    %c0_i32 = arith.constant 0 : i32
    %c0_i32_0 = arith.constant 0 : i32
    return %c0_i32, %0 : i32, i32
  }
}

</mosaic_0001>

<llo_original>
// kernel: tpu_custom_call.1
$region0: #{tpu_custom_call.1}
  #allocation0 [shape = 'u32[]', space=smem, size = 0x4, offset = 0x4, fixed_abs, tag = 'smem constant byte address 0x4 - core index']
  #allocation1 [shape = 'u32[144,128]{1,0:T(1,128)}', space=vmem, size = 0x12000, scoped, tag = 'internal scratch']
  #allocation2 [shape = 'f32[8,1]{1,0:T(8,128)}', space=vmem, size = 0x1000, scoped, tag = 'scratch operand']
  %s0 = inlined_call_operand.vmem [shape: f32[4,384], index: 0, kind: input, shape index: {}]
  %s1 = inlined_call_operand.vmem [shape: f32[8,4], index: 1, kind: input, shape index: {}]
  %s2 = inlined_call_operand.hbm [shape: s32[1,384], index: 2, kind: output, shape index: {}]
  %s3 = sld [smem:[#allocation0]]
  $region53: #{tpu_custom_call.1} parent=0
    _
  %s5 = ssub.s32 1, %s3
  %s6 = scalar_select 0, %s5, %s3
  $region1: #{tpu_custom_call.1} parent=0
    #allocation3 [shape = 'u8[1024]{0}', space=vmem, size = 0x400, scoped, tag = 'output window, operand 0']
    #allocation4 [shape = 's32[2]{0}', space=sflag, size = 0x8, scoped, tag = 'scoped memory for tpu_custom_call.1']
    %7 = vsyncpa [#allocation4], 0
    %s8 = scalar_lea.sflag [#allocation4], 1
    %9 = vsyncpa %s8, 0
    loop: start=0, step=1, limit=8
    $region2: #{tpu_custom_call.1} parent=1 // loop_pre_header
      _
    $region3: #{tpu_custom_call.1} parent=1 // loop_header
      %s11 = sphi 0, %s15
      %p12 = scmp.ge.s32.totalorder %s11, 8
      %s18 = sphi 0, %s30
      %s19 = sphi 0, %s26
      %s20 = sphi 0, %s18
      %s21 = sphi 0, %s19
      %s22 = sphi 0, %s20
      %s23 = sphi 0, %s21
      %s33 = sphi 0, %s35
      %s36 = sphi 0, %s33
      %s37 = sphi 0, %s36
      %s53 = sphi 0, %s37
      %s57 = sphi 0, %s57
      %s59 = sphi 0, %s57
      %s60 = sphi 0, %s59
      %s74 = sphi 0, %s60
      %s82 = sphi 0, %s84
      %s85 = sphi 0, %s82
      %s86 = sphi 0, %s85
      %s102 = sphi 0, %s86
    $region4: #{tpu_custom_call.1} parent=1 // loop_header_branch
      %14 = sbr.rel (%p12) target = $region8
    $region5: #{tpu_custom_call.1} parent=1 // loop_body
      %s16 = ssub.s32 %s11, 1
      %s17 = ssub.s32 %s11, 2
      %s24 = sadd.s32 1, %s19
      %p25 = scmp.ge.s32.totalorder %s24, 3
      %s26 = scalar_select %p25, 0, %s24
      %s27 = sadd.s32 1, %s18
      %s28 = scalar_select %p25, %s27, %s18
      %p29 = scmp.ge.s32.totalorder %s28, 2
      %s30 = scalar_select %p29, 0, %s28
      %s31 = ssub.s32 %s19, %s26
      %p32 = scmp.eq.s32.totalorder %s31, 0
      %s34 = sadd.s32 %s33, 1
      %s35 = scalar_select %p32, %s33, %s34
      %p38 = pneg %p32
      %p39 = scmp.eq.s32.totalorder %s11, 5
      %p40 = por %p38, %p39
      %p41 = scmp.ne.s32.totalorder %s33, %s36
      %p42 = scmp.eq.s32.totalorder %s11, 0
      %p43 = por %p41, %p42
      %p44 = scmp.ne.s32.totalorder %s33, %s36
      %p45 = scmp.eq.s32.totalorder %s16, 5
      %p46 = por %p44, %p45
      %p47 = scmp.ne.s32.totalorder %s36, %s37
      %p48 = scmp.eq.s32.totalorder %s16, 0
      %p49 = por %p47, %p48
      %p50 = scmp.ne.s32.totalorder %s36, %s37
      %p51 = scmp.eq.s32.totalorder %s17, 5
      %p52 = por %p50, %p51
      %p54 = scmp.ne.s32.totalorder %s37, %s53
      %p55 = scmp.eq.s32.totalorder %s17, 0
      %p56 = por %p54, %p55
      %s58 = sadd.s32 %s57, 1
      %p61 = scmp.eq.s32.totalorder %s11, 5
      %p62 = scmp.ne.s32.totalorder %s57, %s59
      %p63 = scmp.eq.s32.totalorder %s11, 0
      %p64 = por %p62, %p63
      %p65 = scmp.ne.s32.totalorder %s57, %s59
      %p66 = scmp.eq.s32.totalorder %s16, 5
      %p67 = por %p65, %p66
      %p68 = scmp.ne.s32.totalorder %s59, %s60
      %p69 = scmp.eq.s32.totalorder %s16, 0
      %p70 = por %p68, %p69
      %p71 = scmp.ne.s32.totalorder %s59, %s60
      %p72 = scmp.eq.s32.totalorder %s17, 5
      %p73 = por %p71, %p72
      %p75 = scmp.ne.s32.totalorder %s60, %s74
      %p76 = scmp.eq.s32.totalorder %s17, 0
      %p77 = por %p75, %p76
      %s78 = smul.u32 %s19, %s18
      %s79 = smul.u32 %s26, %s30
      %s80 = ssub.s32 %s78, %s79
      %p81 = scmp.eq.s32.totalorder %s80, 0
      %s83 = sadd.s32 %s82, 1
      %s84 = scalar_select %p81, %s82, %s83
      %p87 = pneg %p81
      %p88 = scmp.eq.s32.totalorder %s11, 5
      %p89 = por %p87, %p88
      %p90 = scmp.ne.s32.totalorder %s82, %s85
      %p91 = scmp.eq.s32.totalorder %s11, 0
      %p92 = por %p90, %p91
      %p93 = scmp.ne.s32.totalorder %s82, %s85
      %p94 = scmp.eq.s32.totalorder %s16, 5
      %p95 = por %p93, %p94
      %p96 = scmp.ne.s32.totalorder %s85, %s86
      %p97 = scmp.eq.s32.totalorder %s16, 0
      %p98 = por %p96, %p97
      %p99 = scmp.ne.s32.totalorder %s85, %s86
      %p100 = scmp.eq.s32.totalorder %s17, 5
      %p101 = por %p99, %p100
      %p103 = scmp.ne.s32.totalorder %s86, %s102
      %p104 = scmp.eq.s32.totalorder %s17, 0
      %p105 = por %p103, %p104
      %p106 = scmp.le.s32.totalorder 1, %s11
      %p107 = scmp.lt.s32.totalorder %s11, 7
      %p108 = pnand %p106, %p107
      %p109 = pneg %p108
      // Predicated region
      $region9: #{tpu_custom_call.1} parent=5 // pred_check
        _
      $region10: #{tpu_custom_call.1} parent=5 // pred_check_branch
        %111 = sbr.rel (%p108) target = $region12
      $region11: #{tpu_custom_call.1} parent=5 // pred_region
        %s112 = ssub.s32 %s11, 1
        // Predicated region
        $region13: #{tpu_custom_call.1} parent=11 // pred_check
          %p113 = pneg %p70
        $region14: #{tpu_custom_call.1} parent=11 // pred_check_branch
          %115 = sbr.rel (%p113) target = $region16
        $region15: #{tpu_custom_call.1} parent=11 // pred_region
          _
        $region16: #{tpu_custom_call.1} parent=11 // pred_fallthru
          _
      $region12: #{tpu_custom_call.1} parent=5 // pred_fallthru
        _
      %p116 = scmp.lt.s32.totalorder %s11, 6
      // Predicated region
      $region17: #{tpu_custom_call.1} parent=5 // pred_check
        %p117 = pneg %p116
      $region18: #{tpu_custom_call.1} parent=5 // pred_check_branch
        %119 = sbr.rel (%p117) target = $region20
      $region19: #{tpu_custom_call.1} parent=5 // pred_region
        // Predicated region
        $region21: #{tpu_custom_call.1} parent=19 // pred_check
          %p120 = pneg %p43
        $region22: #{tpu_custom_call.1} parent=19 // pred_check_branch
          %122 = sbr.rel (%p120) target = $region24
        $region23: #{tpu_custom_call.1} parent=19 // pred_region
          %p123 = scmp.lt.s32.totalorder %s19, 2
          %s124 = scalar_select %p123, %s19, 2
          %s125 = smul.addr %s124, 4
          %s126 = scalar_lea.vmem %s0, %s125
        $region24: #{tpu_custom_call.1} parent=19 // pred_fallthru
          _
      $region20: #{tpu_custom_call.1} parent=5 // pred_fallthru
        _
      %p127 = scmp.le.s32.totalorder 1, %s11
      %p128 = scmp.lt.s32.totalorder %s11, 7
      %p129 = pnand %p127, %p128
      %p130 = pneg %p129
      // Predicated region
      $region25: #{tpu_custom_call.1} parent=5 // pred_check
        _
      $region26: #{tpu_custom_call.1} parent=5 // pred_check_branch
        %132 = sbr.rel (%p129) target = $region28
      $region27: #{tpu_custom_call.1} parent=5 // pred_region
        %s133 = ssub.s32 %s11, 1
        %p134 = scmp.lt.s32.totalorder %s21, 2
        %s135 = scalar_select %p134, %s21, 2
        %s136 = smul.addr %s135, 4
        %s137 = scalar_lea.vmem %s0, %s136
        %p138 = pneg %p49
        %p139 = pneg %p46
        %p140 = pneg %p70
        %p141 = pneg %p67
        %p142 = pneg %p98
        %p143 = pneg %p95
        %s144 = sand.u32 %s85, 1
        %s145 = scalar_lea.sflag [#allocation4], %s144
        %s146 = sand.u32 %s85, 1
        %s147 = scalar_lea.vmem [#allocation3], %s146
        %p148 = scmp.lt.s32.totalorder %s21, 2
        %s149 = scalar_select %p148, %s21, 2
        %s150 = smul.addr %s149, 4
        %s151 = scalar_lea.vmem %s0, %s150
        %s152 = smul.u32 %s21, %s20
        %v153 = vld [vmem:[%s151] sm:$0x1]
        %v154 = vld [vmem:[%s151 + $0x1] sm:$0x1]
        %v155 = vld [vmem:[%s151 + $0x2] sm:$0x1]
        %v156 = vld [vmem:[%s151 + $0x3] sm:$0x1]
        %v157 = vld [vmem:[%s1] sm:$0xff]
        %v158 = vsub.f32 %v155, %v153
        %v159 = vsub.f32 %v156, %v154
        %v160 = vmul.f32 %v158, %v159
        %162 = vrot.lane.b32.xlu0 %v157, 2
        %v163 = vpop.permute.xlu0 %162
        %v165 = vsub.f32 %v157, %v163
        %167 = vrot.lane.b32.xlu0 %v165, 127
        %v168 = vpop.permute.xlu0 %167
        %v170 = vmul.f32 %v165, %v168
        %171 = vset.pattern.permute.xlu0 2
        %172 = vperm.xlu0 %171, %v157
        %v173 = vpop.permute.xlu0 %172
        %v175 = vlaneseq
        %v176 = vshrl.u32 %v175, 7
        %v177 = vsub.s32 0, %v176
        %v178 = vrot.slane %v155, %v177
        %v179 = vmin.f32 %v173, %v178
        %180 = vset.pattern.permute.xlu0 0
        %181 = vperm.xlu0 %180, %v157
        %v182 = vpop.permute.xlu0 %181
        %v184 = vlaneseq
        %v185 = vshrl.u32 %v184, 7
        %v186 = vsub.s32 0, %v185
        %v187 = vrot.slane %v153, %v186
        %v188 = vmax.f32 %v182, %v187
        %v189 = vsub.f32 %v179, %v188
        %v190 = vmax.f32 %v189, 0.0
        %191 = vset.pattern.permute.xlu0 3
        %192 = vperm.xlu0 %191, %v157
        %v193 = vpop.permute.xlu0 %192
        %v195 = vlaneseq
        %v196 = vshrl.u32 %v195, 7
        %v197 = vsub.s32 0, %v196
        %v198 = vrot.slane %v156, %v197
        %v199 = vmin.f32 %v193, %v198
        %200 = vset.pattern.permute.xlu0 1
        %201 = vperm.xlu0 %200, %v157
        %v202 = vpop.permute.xlu0 %201
        %v204 = vlaneseq
        %v205 = vshrl.u32 %v204, 7
        %v206 = vsub.s32 0, %v205
        %v207 = vrot.slane %v154, %v206
        %v208 = vmax.f32 %v202, %v207
        %v209 = vsub.f32 %v199, %v208
        %v210 = vmax.f32 %v209, 0.0
        %v211 = vmul.f32 %v190, %v210
        %213 = vset.pattern.permute.xlu0 2
        %214 = vperm.xlu0 %213, %v170
        %v215 = vpop.permute.xlu0 %214
        %v217 = vlaneseq
        %v218 = vshrl.u32 %v217, 7
        %v219 = vsub.s32 0, %v218
        %v220 = vrot.slane %v160, %v219
        %v221 = vadd.f32 %v215, %v220
        %v222 = vsub.f32 %v221, %v211
        %v223 = vmax.f32 %v222, 1e-06
        %v224 = vrcp.pop %v223
        %v225 = vmul.f32 %v211, %v224
        %v226 = vlaneseq
        %v227 = vshrl.u32 %v226, 7
        %vm228 = vcmp.lt.s32.totalorder %v227, 5
        %v229 = vsel %vm228, 1, 0
        %vm230 = vcmp.eq.s32.totalorder %v229, 1
        %v231 = vsel %vm230, %v225, -1.0
        %v232 = vlaneseq
        %v233 = vand.u32 %v232, 127
        %s234 = smul.u32 %s21, 128
        %v235 = vstv %s234
        %v236 = vadd.s32 %v233, %v235
        %vm237 = vcmp.lt.s32.totalorder %v236, 300
        %v238 = vsel %vm237, 1, 0
        %vm239 = vcmp.eq.s32.totalorder %v238, 1
        %v240 = vsel %vm239, %v231, -1.0
        %p241 = scmp.eq.s32.totalorder %s20, 0
        %p242 = scmp.eq.s32.totalorder %s21, 0
        %p243 = pnand %p241, %p242
        %p244 = pneg %p243
        // Predicated region
        $region29: #{tpu_custom_call.1} parent=27 // pred_check
          _
        $region30: #{tpu_custom_call.1} parent=27 // pred_check_branch
          %246 = sbr.rel (%p243) target = $region32
        $region31: #{tpu_custom_call.1} parent=27 // pred_region
          %vm247 = vcmask 7168
          %248 = vst.msk [vmem:[#allocation2] sm:$0xff] %vm247, -1.0
        $region32: #{tpu_custom_call.1} parent=27 // pred_fallthru
          _
        // Predicated region
        $region33: #{tpu_custom_call.1} parent=27 // pred_check
          %p249 = pneg %p241
        $region34: #{tpu_custom_call.1} parent=27 // pred_check_branch
          %251 = sbr.rel (%p249) target = $region36
        $region35: #{tpu_custom_call.1} parent=27 // pred_region
          %v252 = vld [vmem:[#allocation2] sm:$0xff]
          %253 = vmax.xlane.f32.xlu0 %v240
          %v254 = vpop.xlane.xlu0 %253
          %v255 = vmax.f32 %v252, %v254
          %vm256 = vcmask 7168
          %257 = vst.msk [vmem:[#allocation2] sm:$0xff] %vm256, %v255
        $region36: #{tpu_custom_call.1} parent=27 // pred_fallthru
          _
        %p258 = scmp.eq.s32.totalorder %s20, 1
        // Predicated region
        $region37: #{tpu_custom_call.1} parent=27 // pred_check
          %p259 = pneg %p258
        $region38: #{tpu_custom_call.1} parent=27 // pred_check_branch
          %261 = sbr.rel (%p259) target = $region40
        $region39: #{tpu_custom_call.1} parent=27 // pred_region
          %v262 = vrot.slane %v240, 4
          %v263 = vmax.f32 %v240, %v262
          %v264 = vrot.slane %v263, 2
          %v265 = vmax.f32 %v263, %v264
          %v266 = vrot.slane %v265, 1
          %v267 = vmax.f32 %v265, %v266
          %vm268 = vcmp.eq.f32.partialorder %v240, %v267
          %v269 = vsel %vm268, %v227, 8
          %v270 = vrot.slane %v269, 4
          %vm271 = vcmp.lt.s32.totalorder %v269, %v270
          %v272 = vsel %vm271, %v269, %v270
          %v273 = vrot.slane %v272, 2
          %vm274 = vcmp.lt.s32.totalorder %v272, %v273
          %v275 = vsel %vm274, %v272, %v273
          %v276 = vrot.slane %v275, 1
          %vm277 = vcmp.lt.s32.totalorder %v275, %v276
          %v278 = vsel %vm277, %v275, %v276
          %v279 = vld [vmem:[#allocation2] sm:$0xff]
          %vm280 = vcmp.ge.f32.partialorder %v267, 0.0
          %vm281 = vcmp.lt.f32.partialorder %v267, 0.5
          %vm282 = vmand %vm280, %vm281
          %v283 = vsel %vm282, 0, 4294967295
          %vm284 = vcmp.ge.f32.partialorder %v267, 0.5
          %v285 = vadd.s32 %v278, 1
          %v286 = vsel %vm284, %v285, %v283
          %288 = vset.pattern.permute.xlu0 0
          %289 = vperm.xlu0 %288, %v279
          %v290 = vpop.permute.xlu0 %289
          %vm292 = vcmp.eq.f32.partialorder %v240, %v290
          %vm293 = vcmp.ge.f32.partialorder %v279, 0.0
          %v294 = vsel %vm293, 1, 0
          %295 = vset.pattern.permute.xlu0 0
          %296 = vperm.xlu0 %295, %v294
          %v297 = vpop.permute.xlu0 %296
          %vm298 = vcmp.eq.s32.totalorder %v297, 1
          %vm299 = vmand %vm292, %vm298
          %v300 = vsel %vm299, %v227, 4294967295
          %v301 = vrot.slane %v300, 4
          %vm302 = vcmp.gt.s32.totalorder %v300, %v301
          %v303 = vsel %vm302, %v300, %v301
          %v304 = vrot.slane %v303, 2
          %vm305 = vcmp.gt.s32.totalorder %v303, %v304
          %v306 = vsel %vm305, %v303, %v304
          %v307 = vrot.slane %v306, 1
          %vm308 = vcmp.gt.s32.totalorder %v306, %v307
          %v309 = vsel %vm308, %v306, %v307
          %vm310 = vcmp.ge.s32.totalorder %v309, 0
          %v311 = vadd.s32 %v309, 1
          %v312 = vsel %vm310, %v311, %v286
          %313 = vst [vmem:[%s147] sm:$0x1] %v312
        $region40: #{tpu_custom_call.1} parent=27 // pred_fallthru
          _
        %s314 = sand.u32 %s85, 1
        %s315 = scalar_lea.sflag [#allocation4], %s314
        %s316 = sand.u32 %s85, 1
        %s317 = scalar_lea.vmem [#allocation3], %s316
        // Predicated region
        $region41: #{tpu_custom_call.1} parent=27 // pred_check
          %p318 = pneg %p95
        $region42: #{tpu_custom_call.1} parent=27 // pred_check_branch
          %320 = sbr.rel (%p318) target = $region44
        $region43: #{tpu_custom_call.1} parent=27 // pred_region
          %s321 = smul.u32 %s21, %s20
          %s323 = ssub.s32 16, 16
          %324 = vsyncadd %s315, %s323
          %s325 = smul.addr %s321, 16
          %s326 = scalar_lea.hbm %s2, %s325
          %s328 = sshll.u32 %s317, 4
          %s329 = int_to_ptr.vmem [resolvable:$true] %s328
          %331 = dma.vmem_to_hbm [thread:$0]  %s329, 16, %s326, %s315
        $region44: #{tpu_custom_call.1} parent=27 // pred_fallthru
          _
      $region28: #{tpu_custom_call.1} parent=5 // pred_fallthru
        _
      %p332 = scmp.le.s32.totalorder 2, %s11
      // Predicated region
      $region45: #{tpu_custom_call.1} parent=5 // pred_check
        %p333 = pneg %p332
      $region46: #{tpu_custom_call.1} parent=5 // pred_check_branch
        %335 = sbr.rel (%p333) target = $region48
      $region47: #{tpu_custom_call.1} parent=5 // pred_region
        %s336 = ssub.s32 %s11, 2
        // Predicated region
        $region49: #{tpu_custom_call.1} parent=47 // pred_check
          %p337 = pneg %p101
        $region50: #{tpu_custom_call.1} parent=47 // pred_check_branch
          %339 = sbr.rel (%p337) target = $region52
        $region51: #{tpu_custom_call.1} parent=47 // pred_region
          %s340 = sand.u32 %s86, 1
          %s341 = scalar_lea.sflag [#allocation4], %s340
          %s342 = sand.u32 %s86, 1
          %s343 = scalar_lea.vmem [#allocation3], %s342
          %344 = dma.done %s341, 16
        $region52: #{tpu_custom_call.1} parent=47 // pred_fallthru
          _
      $region48: #{tpu_custom_call.1} parent=5 // pred_fallthru
        _
    $region6: #{tpu_custom_call.1} parent=1 // loop_footer
      %s15 = sadd.s32 1, %s11
    $region7: #{tpu_custom_call.1} parent=1 // loop_footer_branch
      %10 = sbr.rel target = $region3
    $region8: #{tpu_custom_call.1} parent=1 // loop_exit
      _
    %345 = vsyncpa [#allocation4], 1
    %s346 = scalar_lea.sflag [#allocation4], 1
    %347 = vsyncpa %s346, 1

</llo_original>
